<compile_context>
chip_gen: v7x
topology: tpu7x:2x2x1
jax: 0.10.0
libtpu: 0.0.40
codegen_flags: <defaults>
</compile_context>

<pallas_src>
import jax
import jax.numpy as jnp
from jax.experimental import pallas as pl
from jax.experimental.pallas import tpu as pltpu

_LANES = 128


def _sigmoid_add_sigmoid_kernel(x_ref, o_ref):
    x = x_ref[...]
    # Keep native precision for f32 / bf16 (bf16 VPU+EUP exist on v6e/v7x);
    # upcast anything else to f32 for safety.
    compute_dtype = x.dtype
    if compute_dtype not in (jnp.float32, jnp.bfloat16):
        compute_dtype = jnp.float32
    x = x.astype(compute_dtype)

    half = jnp.asarray(0.5, compute_dtype)
    # sigmoid(x) = 0.5 * tanh(0.5 * x) + 0.5          (1 EUP op)
    s = half * jnp.tanh(half * x) + half
    # sigmoid(s + s) = sigmoid(2*s) = 0.5 * tanh(s) + 0.5   (1 EUP op)
    y = half * jnp.tanh(s) + half
    o_ref[...] = y.astype(o_ref.dtype)


def sigmoid_add_sigmoid(x: jax.Array) -> jax.Array:
    """Elementwise sigmoid(sigmoid(x) + sigmoid(x)) via a Pallas TPU kernel."""
    orig_shape = x.shape
    orig_dtype = x.dtype
    n = x.size

    # --- Lane-dense 2-D view: pad flat length to a multiple of 128. ---------
    flat = x.reshape(-1)
    pad = (-n) % _LANES
    if pad:
        flat = jnp.pad(flat, (0, pad))
    rows = flat.size // _LANES
    flat2 = flat.reshape(rows, _LANES)

    # --- Block sizing: biggest 8-aligned block up to ~2 MiB per grid step. --
    itemsize = jnp.dtype(orig_dtype).itemsize
    target_block_rows = max(8, (2 * 1024 * 1024) // (_LANES * itemsize))
    block_rows = min(rows, target_block_rows)
    if block_rows < rows:
        # Tiled case: sublane-aligned block; Pallas masks a ragged last block.
        block_rows = max(8, (block_rows // 8) * 8)
    elif rows > 16 and rows * _LANES * itemsize >= (1 << 20):
        # Would be a single mega-block for a >=1 MiB input: split into >= 2
        # grid steps so v7x's two TensorCores both stream.
        block_rows = max(8, ((pl.cdiv(rows, 2) + 7) // 8) * 8)
    grid = (pl.cdiv(rows, block_rows),)

    out = pl.pallas_call(
        _sigmoid_add_sigmoid_kernel,
        out_shape=jax.ShapeDtypeStruct((rows, _LANES), orig_dtype),
        grid_spec=pl.GridSpec(
            grid=grid,
            in_specs=[pl.BlockSpec((block_rows, _LANES), lambda i: (i, 0))],
            out_specs=pl.BlockSpec((block_rows, _LANES), lambda i: (i, 0)),
        ),
        compiler_params=pltpu.CompilerParams(
            dimension_semantics=("parallel",),
            # Explicit budget with headroom: 2 MiB block, double-buffered in +
            # out (~8 MiB live) fits comfortably on v5e/v6e/v7x.
            vmem_limit_bytes=32 * 1024 * 1024,
        ),
    )(flat2)

    out_flat = out.reshape(-1)
    if pad:
        out_flat = out_flat[:n]
    return out_flat.reshape(orig_shape)


def _reference(x):
    s = jax.nn.sigmoid(x)
    return jax.nn.sigmoid(s + s)


if __name__ == "__main__":
    key = jax.random.PRNGKey(0)

    # NCHW shape matching the PyTorch module's elementwise forward.
    x = jax.random.normal(key, (2, 4, 16, 16), dtype=jnp.float32)
    y = jax.block_until_ready(sigmoid_add_sigmoid(x))
    assert y.shape == x.shape and y.dtype == x.dtype
    assert jnp.allclose(y, _reference(x), atol=1e-5, rtol=1e-5)

    # Second small case exercising the pad-to-128 path (size not % 128).
    x2 = jax.random.normal(jax.random.PRNGKey(1), (3, 5, 7, 11), dtype=jnp.float32)
    y2 = jax.block_until_ready(sigmoid_add_sigmoid(x2))
    assert y2.shape == x2.shape and y2.dtype == x2.dtype
    assert jnp.allclose(y2, _reference(x2), atol=1e-5, rtol=1e-5)

    print("KERNEL_OK")
</pallas_src>

<mosaic_0001>
module attributes {stable_mosaic.version = 11 : i64} {
  func.func @_sigmoid_add_sigmoid_kernel(%arg0: i32, %arg1: memref<16x128xf32, #tpu.memory_space<vmem>>, %arg2: memref<16x128xf32, #tpu.memory_space<vmem>>) attributes {dimension_semantics = [#tpu.dimension_semantics<parallel>], iteration_bounds = array<i64: 1>, scalar_prefetch = 0 : i64, scratch_operands = 0 : i64, tpu.core_type = #tpu.core_type<tc>, window_params = [{transform_indices = @transform_0, window_bounds = array<i64: 16, 128>}, {transform_indices = @transform_1, window_bounds = array<i64: 16, 128>}]} {
    %c0 = arith.constant 0 : index
    %c0_0 = arith.constant 0 : index
    %0 = vector.load %arg1[%c0, %c0_0] : memref<16x128xf32, #tpu.memory_space<vmem>>, vector<16x128xf32>
    %cst = arith.constant 5.000000e-01 : f32
    %1 = vector.broadcast %cst : f32 to vector<16x128xf32>
    %2 = arith.mulf %1, %0 : vector<16x128xf32>
    %3 = math.tanh %2 : vector<16x128xf32>
    %cst_1 = arith.constant 5.000000e-01 : f32
    %4 = vector.broadcast %cst_1 : f32 to vector<16x128xf32>
    %5 = arith.mulf %4, %3 : vector<16x128xf32>
    %cst_2 = arith.constant 5.000000e-01 : f32
    %6 = vector.broadcast %cst_2 : f32 to vector<16x128xf32>
    %7 = arith.addf %5, %6 : vector<16x128xf32>
    %8 = math.tanh %7 : vector<16x128xf32>
    %cst_3 = arith.constant 5.000000e-01 : f32
    %9 = vector.broadcast %cst_3 : f32 to vector<16x128xf32>
    %10 = arith.mulf %9, %8 : vector<16x128xf32>
    %cst_4 = arith.constant 5.000000e-01 : f32
    %11 = vector.broadcast %cst_4 : f32 to vector<16x128xf32>
    %12 = arith.addf %10, %11 : vector<16x128xf32>
    %c0_5 = arith.constant 0 : index
    %c0_6 = arith.constant 0 : index
    %13 = vector.load %arg2[%c0_5, %c0_6] : memref<16x128xf32, #tpu.memory_space<vmem>>, vector<16x128xf32>
    tpu.vector_store %arg2[%c0_5, %c0_6], %12 {strides = array<i32>} : memref<16x128xf32, #tpu.memory_space<vmem>>, vector<16x128xf32>,
    return
  }
  func.func @transform_0(%arg0: i32) -> (i32, i32) {
    %c0_i32 = arith.constant 0 : i32
    %c0_i32_0 = arith.constant 0 : i32
    return %arg0, %c0_i32 : i32, i32
  }
  func.func @transform_1(%arg0: i32) -> (i32, i32) {
    %c0_i32 = arith.constant 0 : i32
    %c0_i32_0 = arith.constant 0 : i32
    return %arg0, %c0_i32 : i32, i32
  }
}

</mosaic_0001>

<llo_original>
// kernel: tpu_custom_call.1
$region0: #{tpu_custom_call.1}
  #allocation0 [shape = 'u32[]', space=smem, size = 0x4, offset = 0x4, fixed_abs, tag = 'smem constant byte address 0x4 - core index']
  #allocation1 [shape = 'u32[144,128]{1,0:T(1,128)}', space=vmem, size = 0x12000, scoped, tag = 'internal scratch']
  %s0 = inlined_call_operand.hbm [shape: f32[16,128], index: 0, kind: input, shape index: {}]
  %s1 = inlined_call_operand.hbm [shape: f32[16,128], index: 1, kind: output, shape index: {}]
  %s2 = sld [smem:[#allocation0]]
  $region18: #{tpu_custom_call.1} parent=0
    _
  %s4 = ssub.s32 1, %s2
  %s5 = scalar_select 0, %s4, %s2
  $region1: #{tpu_custom_call.1} parent=0
    #allocation2 [shape = 'u8[8192]{0}', space=vmem, size = 0x2000, scoped, tag = 'input window, operand 0, single buffered']
    #allocation3 [shape = 's32[1]{0}', space=sflag, size = 0x4, scoped, tag = 'scoped memory for tpu_custom_call.1']
    #allocation4 [shape = 's32[1]{0}', space=sflag, size = 0x4, scoped, tag = 'scoped memory for tpu_custom_call.1']
    #allocation5 [shape = 'u8[8192]{0}', space=vmem, size = 0x2000, scoped, tag = 'output window, operand 0, single buffered']
    %6 = vsyncpa [#allocation3], 0
    %7 = vsyncpa [#allocation4], 0
    // Predicated region
    $region2: #{tpu_custom_call.1} parent=1 // pred_check
      _
    $region3: #{tpu_custom_call.1} parent=1 // pred_check_branch
      %9 = sbr.rel (0) target = $region5
    $region4: #{tpu_custom_call.1} parent=1 // pred_region
      %s11 = ssub.s32 256, 256
      %12 = vsyncadd [#allocation3], %s11
      %s13 = sshll.u32 [#allocation2], 4
      %s14 = int_to_ptr.vmem [resolvable:$true] %s13
      %19 = dma.hbm_to_vmem [thread:$0]  %s0, 256, %s14, [#allocation3], 128, 128, 8
    $region5: #{tpu_custom_call.1} parent=1 // pred_fallthru
      _
    // Predicated region
    $region6: #{tpu_custom_call.1} parent=1 // pred_check
      _
    $region7: #{tpu_custom_call.1} parent=1 // pred_check_branch
      %21 = sbr.rel (0) target = $region9
    $region8: #{tpu_custom_call.1} parent=1 // pred_region
      %22 = dma.done [#allocation3], 256
    $region9: #{tpu_custom_call.1} parent=1 // pred_fallthru
      _
    %v23 = vld [vmem:[#allocation2] sm:$0xff]
    %v24 = vld [vmem:[#allocation2 + $0x8] sm:$0xff]
    %v25 = vmul.f32 %v23, 0.5
    %v26 = vmul.f32 %v24, 0.5
    %v27 = vtanh.pop %v25
    %v28 = vtanh.pop %v26
    %v29 = vmul.f32 %v27, 0.5
    %v30 = vmul.f32 %v28, 0.5
    %v31 = vadd.f32 %v29, 0.5
    %v32 = vadd.f32 %v30, 0.5
    %v33 = vtanh.pop %v31
    %v34 = vtanh.pop %v32
    %v35 = vmul.f32 %v33, 0.5
    %v36 = vmul.f32 %v34, 0.5
    %v37 = vadd.f32 %v35, 0.5
    %v38 = vadd.f32 %v36, 0.5
    %39 = vst [vmem:[#allocation5] sm:$0xff] %v37
    %40 = vst [vmem:[#allocation5 + $0x8] sm:$0xff] %v38
    // Predicated region
    $region10: #{tpu_custom_call.1} parent=1 // pred_check
      _
    $region11: #{tpu_custom_call.1} parent=1 // pred_check_branch
      %42 = sbr.rel (0) target = $region13
    $region12: #{tpu_custom_call.1} parent=1 // pred_region
      %s44 = ssub.s32 256, 256
      %45 = vsyncadd [#allocation4], %s44
      %s46 = sshll.u32 [#allocation5], 4
      %s47 = int_to_ptr.vmem [resolvable:$true] %s46
      %52 = dma.vmem_to_hbm [thread:$0]  %s47, 256, %s1, [#allocation4], 128, 128, 8
    $region13: #{tpu_custom_call.1} parent=1 // pred_fallthru
      _
    // Predicated region
    $region14: #{tpu_custom_call.1} parent=1 // pred_check
      _
    $region15: #{tpu_custom_call.1} parent=1 // pred_check_branch
      %54 = sbr.rel (0) target = $region17
    $region16: #{tpu_custom_call.1} parent=1 // pred_region
      %55 = dma.done [#allocation4], 256
    $region17: #{tpu_custom_call.1} parent=1 // pred_fallthru
      _
    %56 = vsyncpa [#allocation3], 1
    %57 = vsyncpa [#allocation4], 1

</llo_original>
